<compile_context>
chip_gen: v5e
topology: v5e:2x2
jax: 0.10.0
libtpu: 0.0.40
codegen_flags: <defaults>
</compile_context>

<pallas_src>
import numpy as np
import jax
import jax.numpy as jnp
from jax.experimental import pallas as pl
from jax.experimental.pallas import tpu as pltpu


# ----------------------------------------------------------------------------
# Deterministic parameter construction (mirrors FilterbankUtilities + __init__)
# ----------------------------------------------------------------------------
def linear_tri_filterbank(num_filters: int, frequency_dim: int) -> np.ndarray:
    """Linearly spaced triangular filterbank, shape (frequency_dim, num_filters)."""
    pts = np.linspace(0.0, frequency_dim - 1, num_filters + 2)
    bins = np.arange(frequency_dim, dtype=np.float32)
    fb = np.zeros((frequency_dim, num_filters), dtype=np.float32)
    for m in range(num_filters):
        left, center, right = pts[m], pts[m + 1], pts[m + 2]
        rise = (bins - left) / max(center - left, 1e-6)
        fall = (right - bins) / max(right - center, 1e-6)
        fb[:, m] = np.clip(np.minimum(rise, fall), 0.0, None)
    return fb


# ----------------------------------------------------------------------------
# Pallas kernel: one grid step = one (epoch, time-tile).
#   out[t, :] = sum_c  x[c, t, :] @ fb_bd[c]          (fb_bd is block-diagonal)
# which equals torch.cat([x[:,c] @ (sigmoid(w[:,c]) * tri) for c], dim=2).
# ----------------------------------------------------------------------------
def _filterbank_kernel(x_ref, fb_ref, o_ref):
    # x_ref : (C, Tt, F)       -- this epoch's time-tile, all channels
    # fb_ref: (C, F, C*NF)     -- block-diagonal fused filterbank (tiny, shared)
    # o_ref : (Tt, C*NF)       -- lane-contiguous fused output tile
    num_channels = x_ref.shape[0]
    acc = jnp.dot(x_ref[0], fb_ref[0], preferred_element_type=jnp.float32)
    for c in range(1, num_channels):  # static, small C -> unrolled MXU dots
        acc = acc + jnp.dot(x_ref[c], fb_ref[c], preferred_element_type=jnp.float32)
    o_ref[...] = acc.astype(o_ref.dtype)


def _choose_row_tile(T: int, max_tile: int = 512) -> int:
    """Largest time-tile that divides T, is a multiple of 8, and is <= max_tile."""
    if T <= max_tile:
        return T
    start = max_tile - (max_tile % 8)
    for tt in range(start, 7, -8):
        if T % tt == 0:
            return tt
    # TODO(synk): support ragged T with a partial (masked) last tile.
    return T


def learnable_filterbank_forward(x, filter_weights, triangular_matrix):
    """x: (E, C, T, F) float32. Returns (E, T, C * NF) float32 (== torch.cat dim=2)."""
    E, C, T, F = x.shape
    NF, C_w = filter_weights.shape
    assert C_w == C
    assert triangular_matrix.shape == (F, NF)
    CNF = C * NF

    # --- tiny weight prep (O(C^2 * F * NF) elements), folded once per call ---
    # fb[c, f, n] = sigmoid(w[n, c]) * tri[f, n]
    w_sig = jax.nn.sigmoid(filter_weights)                       # (NF, C)
    fb = w_sig.T[:, None, :] * triangular_matrix[None, :, :]     # (C, F, NF)
    # Block-diagonal embed so channel c's result lands in columns [c*NF, (c+1)*NF):
    # fb_bd[c, f, d*NF + n] = fb[c, f, n] * (c == d)
    eye_c = jnp.eye(C, dtype=fb.dtype)
    fb_bd = jnp.einsum("cfn,cd->cfdn", fb, eye_c).reshape(C, F, CNF)

    tile_t = _choose_row_tile(T)
    grid = (E, T // tile_t)

    out = pl.pallas_call(
        _filterbank_kernel,
        out_shape=jax.ShapeDtypeStruct((E, T, CNF), x.dtype),
        grid_spec=pltpu.PrefetchScalarGridSpec(
            num_scalar_prefetch=0,
            grid=grid,
            in_specs=[
                # (E, C, T, F): epoch axis squeezed, full C, T tiled, full F.
                pl.BlockSpec((None, C, tile_t, F), lambda e, t: (e, 0, t, 0)),
                # Block-diagonal filterbank: whole thing, resident across steps.
                pl.BlockSpec((C, F, CNF), lambda e, t: (0, 0, 0)),
            ],
            # Output already in final (E, T, C*NF) layout -> no wrapper transpose.
            out_specs=pl.BlockSpec((None, tile_t, CNF), lambda e, t: (e, t, 0)),
        ),
        compiler_params=pltpu.CompilerParams(
            dimension_semantics=("parallel", "parallel"),
            vmem_limit_bytes=32 * 1024 * 1024,  # tiles sized well below this
        ),
    )(x, fb_bd)
    return out


# ----------------------------------------------------------------------------
# Pure-JAX reference of the PyTorch forward (for verification)
# ----------------------------------------------------------------------------
def reference_forward(x, filter_weights, triangular_matrix):
    E, C, T, F = x.shape
    chnls = []
    for c in range(C):
        data = x[:, c, :, :]
        fb = jax.nn.sigmoid(filter_weights[:, c])[None, :] * triangular_matrix
        chnls.append(jnp.matmul(data, fb))
    return jnp.concatenate(chnls, axis=2)


if __name__ == "__main__":
    # Small, module-consistent shapes
    num_epochs = 2      # E (batch)
    num_channels = 4    # C
    time_dim = 16       # T
    frequency_dim = 16  # F
    num_filters = 8     # NF

    key = jax.random.PRNGKey(0)
    kx, kw = jax.random.split(key)

    x = jax.random.normal(
        kx, (num_epochs, num_channels, time_dim, frequency_dim), dtype=jnp.float32
    )
    filter_weights = jax.random.normal(
        kw, (num_filters, num_channels), dtype=jnp.float32
    )
    triangular_matrix = jnp.asarray(
        linear_tri_filterbank(num_filters, frequency_dim), dtype=jnp.float32
    )

    fwd = jax.jit(learnable_filterbank_forward)
    out = fwd(x, filter_weights, triangular_matrix)
    out = jax.block_until_ready(out)

    ref = reference_forward(x, filter_weights, triangular_matrix)
    assert out.shape == (num_epochs, time_dim, num_channels * num_filters)
    np.testing.assert_allclose(np.asarray(out), np.asarray(ref), rtol=1e-5, atol=1e-5)

    print("KERNEL_OK")
</pallas_src>

<mosaic_0001>
module attributes {stable_mosaic.version = 11 : i64} {
  func.func @_filterbank_kernel(%arg0: i32, %arg1: i32, %arg2: memref<1x4x16x16xf32, #tpu.memory_space<vmem>>, %arg3: memref<4x16x32xf32, #tpu.memory_space<vmem>>, %arg4: memref<1x16x32xf32, #tpu.memory_space<vmem>>) attributes {dimension_semantics = [#tpu.dimension_semantics<parallel>, #tpu.dimension_semantics<parallel>], iteration_bounds = array<i64: 2, 1>, scalar_prefetch = 0 : i64, scratch_operands = 0 : i64, tpu.core_type = #tpu.core_type<tc>, window_params = [{transform_indices = @transform_0, window_bounds = array<i64: 1, 4, 16, 16>}, {pipeline_mode = #tpu.pipeline_mode<synchronous>, transform_indices = @transform_1, window_bounds = array<i64: 4, 16, 32>}, {transform_indices = @transform_2, window_bounds = array<i64: 1, 16, 32>}]} {
    %c0 = arith.constant 0 : index
    %c0_0 = arith.constant 0 : index
    %c0_1 = arith.constant 0 : index
    %c0_2 = arith.constant 0 : index
    %0 = vector.load %arg2[%c0, %c0_0, %c0_1, %c0_2] : memref<1x4x16x16xf32, #tpu.memory_space<vmem>>, vector<1x1x16x16xf32>
    %1 = vector.shape_cast %0 : vector<1x1x16x16xf32> to vector<16x16xf32>
    %c0_3 = arith.constant 0 : index
    %c0_4 = arith.constant 0 : index
    %c0_5 = arith.constant 0 : index
    %2 = vector.load %arg3[%c0_3, %c0_4, %c0_5] : memref<4x16x32xf32, #tpu.memory_space<vmem>>, vector<1x16x32xf32>
    %3 = vector.shape_cast %2 : vector<1x16x32xf32> to vector<16x32xf32>
    %cst = arith.constant dense<0.000000e+00> : vector<16x32xf32>
    %4 = tpu.matmul %1, %3, %cst {dimension_numbers = #tpu.dot_dimension_numbers<[1], [0], [0], [1], [0, 0, 1, 1], [], []>} : vector<16x16xf32>, vector<16x32xf32>, vector<16x32xf32> -> vector<16x32xf32>
    %c0_6 = arith.constant 0 : index
    %c1 = arith.constant 1 : index
    %c0_7 = arith.constant 0 : index
    %c0_8 = arith.constant 0 : index
    %5 = vector.load %arg2[%c0_6, %c1, %c0_7, %c0_8] : memref<1x4x16x16xf32, #tpu.memory_space<vmem>>, vector<1x1x16x16xf32>
    %6 = vector.shape_cast %5 : vector<1x1x16x16xf32> to vector<16x16xf32>
    %c1_9 = arith.constant 1 : index
    %c0_10 = arith.constant 0 : index
    %c0_11 = arith.constant 0 : index
    %7 = vector.load %arg3[%c1_9, %c0_10, %c0_11] : memref<4x16x32xf32, #tpu.memory_space<vmem>>, vector<1x16x32xf32>
    %8 = vector.shape_cast %7 : vector<1x16x32xf32> to vector<16x32xf32>
    %cst_12 = arith.constant dense<0.000000e+00> : vector<16x32xf32>
    %9 = tpu.matmul %6, %8, %cst_12 {dimension_numbers = #tpu.dot_dimension_numbers<[1], [0], [0], [1], [0, 0, 1, 1], [], []>} : vector<16x16xf32>, vector<16x32xf32>, vector<16x32xf32> -> vector<16x32xf32>
    %10 = arith.addf %4, %9 : vector<16x32xf32>
    %c0_13 = arith.constant 0 : index
    %c2 = arith.constant 2 : index
    %c0_14 = arith.constant 0 : index
    %c0_15 = arith.constant 0 : index
    %11 = vector.load %arg2[%c0_13, %c2, %c0_14, %c0_15] : memref<1x4x16x16xf32, #tpu.memory_space<vmem>>, vector<1x1x16x16xf32>
    %12 = vector.shape_cast %11 : vector<1x1x16x16xf32> to vector<16x16xf32>
    %c2_16 = arith.constant 2 : index
    %c0_17 = arith.constant 0 : index
    %c0_18 = arith.constant 0 : index
    %13 = vector.load %arg3[%c2_16, %c0_17, %c0_18] : memref<4x16x32xf32, #tpu.memory_space<vmem>>, vector<1x16x32xf32>
    %14 = vector.shape_cast %13 : vector<1x16x32xf32> to vector<16x32xf32>
    %cst_19 = arith.constant dense<0.000000e+00> : vector<16x32xf32>
    %15 = tpu.matmul %12, %14, %cst_19 {dimension_numbers = #tpu.dot_dimension_numbers<[1], [0], [0], [1], [0, 0, 1, 1], [], []>} : vector<16x16xf32>, vector<16x32xf32>, vector<16x32xf32> -> vector<16x32xf32>
    %16 = arith.addf %10, %15 : vector<16x32xf32>
    %c0_20 = arith.constant 0 : index
    %c3 = arith.constant 3 : index
    %c0_21 = arith.constant 0 : index
    %c0_22 = arith.constant 0 : index
    %17 = vector.load %arg2[%c0_20, %c3, %c0_21, %c0_22] : memref<1x4x16x16xf32, #tpu.memory_space<vmem>>, vector<1x1x16x16xf32>
    %18 = vector.shape_cast %17 : vector<1x1x16x16xf32> to vector<16x16xf32>
    %c3_23 = arith.constant 3 : index
    %c0_24 = arith.constant 0 : index
    %c0_25 = arith.constant 0 : index
    %19 = vector.load %arg3[%c3_23, %c0_24, %c0_25] : memref<4x16x32xf32, #tpu.memory_space<vmem>>, vector<1x16x32xf32>
    %20 = vector.shape_cast %19 : vector<1x16x32xf32> to vector<16x32xf32>
    %cst_26 = arith.constant dense<0.000000e+00> : vector<16x32xf32>
    %21 = tpu.matmul %18, %20, %cst_26 {dimension_numbers = #tpu.dot_dimension_numbers<[1], [0], [0], [1], [0, 0, 1, 1], [], []>} : vector<16x16xf32>, vector<16x32xf32>, vector<16x32xf32> -> vector<16x32xf32>
    %22 = arith.addf %16, %21 : vector<16x32xf32>
    %c0_27 = arith.constant 0 : index
    %c0_28 = arith.constant 0 : index
    %c0_29 = arith.constant 0 : index
    %23 = vector.load %arg4[%c0_27, %c0_28, %c0_29] : memref<1x16x32xf32, #tpu.memory_space<vmem>>, vector<1x16x32xf32>
    %24 = vector.shape_cast %23 : vector<1x16x32xf32> to vector<16x32xf32>
    %25 = vector.shape_cast %22 : vector<16x32xf32> to vector<1x16x32xf32>
    tpu.vector_store %arg4[%c0_27, %c0_28, %c0_29], %25 {strides = array<i32>} : memref<1x16x32xf32, #tpu.memory_space<vmem>>, vector<1x16x32xf32>,
    return
  }
  func.func @transform_0(%arg0: i32, %arg1: i32) -> (i32, i32, i32, i32) {
    %c0_i32 = arith.constant 0 : i32
    %c0_i32_0 = arith.constant 0 : i32
    %c0_i32_1 = arith.constant 0 : i32
    return %arg0, %c0_i32, %arg1, %c0_i32_0 : i32, i32, i32, i32
  }
  func.func @transform_1(%arg0: i32, %arg1: i32) -> (i32, i32, i32) {
    %c0_i32 = arith.constant 0 : i32
    %c0_i32_0 = arith.constant 0 : i32
    %c0_i32_1 = arith.constant 0 : i32
    %c0_i32_2 = arith.constant 0 : i32
    return %c0_i32, %c0_i32_0, %c0_i32_1 : i32, i32, i32
  }
  func.func @transform_2(%arg0: i32, %arg1: i32) -> (i32, i32, i32) {
    %c0_i32 = arith.constant 0 : i32
    %c0_i32_0 = arith.constant 0 : i32
    return %arg0, %arg1, %c0_i32 : i32, i32, i32
  }
}

</mosaic_0001>

<llo_original>
// kernel: learnable_filterbank_forward.1
$region0: #{learnable_filterbank_forward.1}
  #allocation0 [shape = 'u32[]', space=smem, size = 0x4, offset = 0x4, fixed_abs, tag = 'smem constant byte address 0x4 - core index']
  #allocation1 [shape = 'u32[72,128]{1,0:T(1,128)}', space=vmem, size = 0x9000, scoped, tag = 'internal scratch']
  %s0 = inlined_call_operand.vmem [shape: f32[2,4,16,16], index: 0, kind: input, shape index: {}]
  %s1 = inlined_call_operand.vmem [shape: f32[4,16,32], index: 1, kind: input, shape index: {}]
  %s2 = inlined_call_operand.hbm [shape: f32[2,16,32], index: 2, kind: output, shape index: {}]
  %s3 = sld [smem:[#allocation0]]
  $region41: #{learnable_filterbank_forward.1} parent=0
    _
  %s5 = ssub.s32 1, %s3
  %s6 = scalar_select 0, %s5, %s3
  $region1: #{learnable_filterbank_forward.1} parent=0
    #allocation2 [shape = 'u8[16384]{0}', space=vmem, size = 0x4000, scoped, tag = 'output window, operand 0']
    #allocation3 [shape = 's32[2]{0}', space=sflag, size = 0x8, scoped, tag = 'scoped memory for learnable_filterbank_forward.1']
    %7 = vsyncpa [#allocation3], 0
    %s8 = scalar_lea.sflag [#allocation3], 1
    %9 = vsyncpa %s8, 0
    loop: start=0, step=1, limit=4
    $region2: #{learnable_filterbank_forward.1} parent=1 // loop_pre_header
      _
    $region3: #{learnable_filterbank_forward.1} parent=1 // loop_header
      %s11 = sphi 0, %s15
      %p12 = scmp.ge.s32.totalorder %s11, 4
      %s18 = sphi 0, %s30
      %s19 = sphi 0, %s26
      %s20 = sphi 0, %s18
      %s21 = sphi 0, %s19
      %s22 = sphi 0, %s20
      %s23 = sphi 0, %s21
      %s35 = sphi 0, %s37
      %s38 = sphi 0, %s35
      %s39 = sphi 0, %s38
      %s55 = sphi 0, %s39
      %s59 = sphi 0, %s59
      %s61 = sphi 0, %s59
      %s62 = sphi 0, %s61
      %s76 = sphi 0, %s62
      %s84 = sphi 0, %s86
      %s87 = sphi 0, %s84
      %s88 = sphi 0, %s87
      %s104 = sphi 0, %s88
    $region4: #{learnable_filterbank_forward.1} parent=1 // loop_header_branch
      %14 = sbr.rel (%p12) target = $region8
    $region5: #{learnable_filterbank_forward.1} parent=1 // loop_body
      %s16 = ssub.s32 %s11, 1
      %s17 = ssub.s32 %s11, 2
      %s24 = sadd.s32 1, %s19
      %p25 = scmp.ge.s32.totalorder %s24, 1
      %s26 = scalar_select %p25, 0, %s24
      %s27 = sadd.s32 1, %s18
      %s28 = scalar_select %p25, %s27, %s18
      %p29 = scmp.ge.s32.totalorder %s28, 2
      %s30 = scalar_select %p29, 0, %s28
      %s31 = ssub.s32 %s18, %s30
      %s32 = ssub.s32 %s19, %s26
      %s33 = sor.u32 %s31, %s32
      %p34 = scmp.eq.s32.totalorder %s33, 0
      %s36 = sadd.s32 %s35, 1
      %s37 = scalar_select %p34, %s35, %s36
      %p40 = pneg %p34
      %p41 = scmp.eq.s32.totalorder %s11, 1
      %p42 = por %p40, %p41
      %p43 = scmp.ne.s32.totalorder %s35, %s38
      %p44 = scmp.eq.s32.totalorder %s11, 0
      %p45 = por %p43, %p44
      %p46 = scmp.ne.s32.totalorder %s35, %s38
      %p47 = scmp.eq.s32.totalorder %s16, 1
      %p48 = por %p46, %p47
      %p49 = scmp.ne.s32.totalorder %s38, %s39
      %p50 = scmp.eq.s32.totalorder %s16, 0
      %p51 = por %p49, %p50
      %p52 = scmp.ne.s32.totalorder %s38, %s39
      %p53 = scmp.eq.s32.totalorder %s17, 1
      %p54 = por %p52, %p53
      %p56 = scmp.ne.s32.totalorder %s39, %s55
      %p57 = scmp.eq.s32.totalorder %s17, 0
      %p58 = por %p56, %p57
      %s60 = sadd.s32 %s59, 1
      %p63 = scmp.eq.s32.totalorder %s11, 1
      %p64 = scmp.ne.s32.totalorder %s59, %s61
      %p65 = scmp.eq.s32.totalorder %s11, 0
      %p66 = por %p64, %p65
      %p67 = scmp.ne.s32.totalorder %s59, %s61
      %p68 = scmp.eq.s32.totalorder %s16, 1
      %p69 = por %p67, %p68
      %p70 = scmp.ne.s32.totalorder %s61, %s62
      %p71 = scmp.eq.s32.totalorder %s16, 0
      %p72 = por %p70, %p71
      %p73 = scmp.ne.s32.totalorder %s61, %s62
      %p74 = scmp.eq.s32.totalorder %s17, 1
      %p75 = por %p73, %p74
      %p77 = scmp.ne.s32.totalorder %s62, %s76
      %p78 = scmp.eq.s32.totalorder %s17, 0
      %p79 = por %p77, %p78
      %s80 = ssub.s32 %s18, %s30
      %s81 = ssub.s32 %s19, %s26
      %s82 = sor.u32 %s80, %s81
      %p83 = scmp.eq.s32.totalorder %s82, 0
      %s85 = sadd.s32 %s84, 1
      %s86 = scalar_select %p83, %s84, %s85
      %p89 = pneg %p83
      %p90 = scmp.eq.s32.totalorder %s11, 1
      %p91 = por %p89, %p90
      %p92 = scmp.ne.s32.totalorder %s84, %s87
      %p93 = scmp.eq.s32.totalorder %s11, 0
      %p94 = por %p92, %p93
      %p95 = scmp.ne.s32.totalorder %s84, %s87
      %p96 = scmp.eq.s32.totalorder %s16, 1
      %p97 = por %p95, %p96
      %p98 = scmp.ne.s32.totalorder %s87, %s88
      %p99 = scmp.eq.s32.totalorder %s16, 0
      %p100 = por %p98, %p99
      %p101 = scmp.ne.s32.totalorder %s87, %s88
      %p102 = scmp.eq.s32.totalorder %s17, 1
      %p103 = por %p101, %p102
      %p105 = scmp.ne.s32.totalorder %s88, %s104
      %p106 = scmp.eq.s32.totalorder %s17, 0
      %p107 = por %p105, %p106
      %p108 = scmp.le.s32.totalorder 1, %s11
      %p109 = scmp.lt.s32.totalorder %s11, 3
      %p110 = pnand %p108, %p109
      %p111 = pneg %p110
      // Predicated region
      $region9: #{learnable_filterbank_forward.1} parent=5 // pred_check
        _
      $region10: #{learnable_filterbank_forward.1} parent=5 // pred_check_branch
        %113 = sbr.rel (%p110) target = $region12
      $region11: #{learnable_filterbank_forward.1} parent=5 // pred_region
        %s114 = ssub.s32 %s11, 1
        // Predicated region
        $region13: #{learnable_filterbank_forward.1} parent=11 // pred_check
          %p115 = pneg %p72
        $region14: #{learnable_filterbank_forward.1} parent=11 // pred_check_branch
          %117 = sbr.rel (%p115) target = $region16
        $region15: #{learnable_filterbank_forward.1} parent=11 // pred_region
          _
        $region16: #{learnable_filterbank_forward.1} parent=11 // pred_fallthru
          _
      $region12: #{learnable_filterbank_forward.1} parent=5 // pred_fallthru
        _
      %p118 = scmp.lt.s32.totalorder %s11, 2
      // Predicated region
      $region17: #{learnable_filterbank_forward.1} parent=5 // pred_check
        %p119 = pneg %p118
      $region18: #{learnable_filterbank_forward.1} parent=5 // pred_check_branch
        %121 = sbr.rel (%p119) target = $region20
      $region19: #{learnable_filterbank_forward.1} parent=5 // pred_region
        // Predicated region
        $region21: #{learnable_filterbank_forward.1} parent=19 // pred_check
          %p122 = pneg %p45
        $region22: #{learnable_filterbank_forward.1} parent=19 // pred_check_branch
          %124 = sbr.rel (%p122) target = $region24
        $region23: #{learnable_filterbank_forward.1} parent=19 // pred_region
          %s125 = smul.u32 2, %s19
          %p126 = scmp.lt.s32.totalorder %s18, 1
          %s127 = scalar_select %p126, %s18, 1
          %p128 = scmp.lt.s32.totalorder %s125, 1
          %s129 = scalar_select %p128, %s125, 1
          %s130 = smul.addr %s127, 8
          %s131 = sadd.s32 %s129, %s130
          %s132 = smul.addr %s131, 8
          %s133 = scalar_lea.vmem %s0, %s132
          %s134 = smul.u32 2, %s19
        $region24: #{learnable_filterbank_forward.1} parent=19 // pred_fallthru
          _
      $region20: #{learnable_filterbank_forward.1} parent=5 // pred_fallthru
        _
      %p135 = scmp.le.s32.totalorder 1, %s11
      %p136 = scmp.lt.s32.totalorder %s11, 3
      %p137 = pnand %p135, %p136
      %p138 = pneg %p137
      // Predicated region
      $region25: #{learnable_filterbank_forward.1} parent=5 // pred_check
        _
      $region26: #{learnable_filterbank_forward.1} parent=5 // pred_check_branch
        %140 = sbr.rel (%p137) target = $region28
      $region27: #{learnable_filterbank_forward.1} parent=5 // pred_region
        %s141 = ssub.s32 %s11, 1
        %s142 = smul.u32 2, %s21
        %p143 = scmp.lt.s32.totalorder %s20, 1
        %s144 = scalar_select %p143, %s20, 1
        %p145 = scmp.lt.s32.totalorder %s142, 1
        %s146 = scalar_select %p145, %s142, 1
        %s147 = smul.addr %s144, 8
        %s148 = sadd.s32 %s146, %s147
        %s149 = smul.addr %s148, 8
        %s150 = scalar_lea.vmem %s0, %s149
        %p151 = pneg %p51
        %p152 = pneg %p48
        %p153 = pneg %p72
        %p154 = pneg %p69
        %p155 = pneg %p100
        %p156 = pneg %p97
        %s157 = sand.u32 %s87, 1
        %s158 = scalar_lea.sflag [#allocation3], %s157
        %s159 = sand.u32 %s87, 1
        %s160 = smul.addr %s159, 16
        %s161 = scalar_lea.vmem [#allocation2], %s160
        %s162 = smul.u32 2, %s21
        %p163 = scmp.lt.s32.totalorder %s20, 1
        %s164 = scalar_select %p163, %s20, 1
        %p165 = scmp.lt.s32.totalorder %s162, 1
        %s166 = scalar_select %p165, %s162, 1
        %s167 = smul.addr %s164, 8
        %s168 = sadd.s32 %s166, %s167
        %s169 = smul.addr %s168, 8
        %s170 = scalar_lea.vmem %s0, %s169
        %s171 = smul.u32 2, %s21
        %s172 = smul.u32 2, %s21
        %v173 = vld [vmem:[%s170] sm:$0xff]
        %v174 = vld [vmem:[%s170 + $0x8] sm:$0xff]
        %v175 = vld [vmem:[%s1] sm:$0xff]
        %v176 = vld [vmem:[%s1 + $0x8] sm:$0xff]
        %s177 = scalar_lea.vmem %s170, 16
        %v178 = vld [vmem:[%s177] sm:$0xff]
        %v179 = vld [vmem:[%s177 + $0x8] sm:$0xff]
        %s180 = scalar_lea.vmem %s1, 16
        %v181 = vld [vmem:[%s180] sm:$0xff]
        %v182 = vld [vmem:[%s180 + $0x8] sm:$0xff]
        %vm183 = vcmask 130048
        %v185 = vsel %vm183, %v178, 0
        %v188 = vsel %vm183, %v179, 0
        %190 = vmatpush.msra.mxu0 0.0
        %191 = vmatpush.msra.mxu0 0.0
        %192 = vmatpush.msra.mxu0 0.0
        %193 = vmatpush.msra.mxu0 0.0
        %194 = vmatpush.msra.mxu0 0.0
        %195 = vmatpush.msra.mxu0 0.0
        %196 = vmatpush.msra.mxu0 0.0
        %197 = vmatpush.msra.mxu0 0.0
        %198 = vmatpush.msra.mxu0 0.0
        %199 = vmatpush.msra.mxu0 0.0
        %200 = vmatpush.msra.mxu0 0.0
        %201 = vmatpush.msra.mxu0 0.0
        %202 = vmatpush.msra.mxu0 0.0
        %203 = vmatpush.msra.mxu0 0.0
        %204 = vmatpush.msra.mxu0 %v182
        %205 = vmatpush.msra.mxu0 %v181
        %206 = vmatmul.f32.gmra.mxu0 %v185
        %v207 = vpop.f32.mrf.mxu0
        %v208 = vadd.f32 0.0, %v207
        %209 = vmatmul.f32.gmra.mxu0 %v188
        %v210 = vpop.f32.mrf.mxu0
        %v211 = vadd.f32 0.0, %v210
        %212 = vdwg.mxu0
        %v214 = vsel %vm183, %v173, 0
        %v217 = vsel %vm183, %v174, 0
        %219 = vmatpush.msra.mxu0 0.0
        %220 = vmatpush.msra.mxu0 0.0
        %221 = vmatpush.msra.mxu0 0.0
        %222 = vmatpush.msra.mxu0 0.0
        %223 = vmatpush.msra.mxu0 0.0
        %224 = vmatpush.msra.mxu0 0.0
        %225 = vmatpush.msra.mxu0 0.0
        %226 = vmatpush.msra.mxu0 0.0
        %227 = vmatpush.msra.mxu0 0.0
        %228 = vmatpush.msra.mxu0 0.0
        %229 = vmatpush.msra.mxu0 0.0
        %230 = vmatpush.msra.mxu0 0.0
        %231 = vmatpush.msra.mxu0 0.0
        %232 = vmatpush.msra.mxu0 0.0
        %233 = vmatpush.msra.mxu0 %v176
        %234 = vmatpush.msra.mxu0 %v175
        %235 = vmatmul.f32.gmra.mxu0 %v214
        %v236 = vpop.f32.mrf.mxu0
        %v237 = vadd.f32 %v208, %v236
        %238 = vmatmul.f32.gmra.mxu0 %v217
        %v239 = vpop.f32.mrf.mxu0
        %v240 = vadd.f32 %v211, %v239
        %241 = vdwg.mxu0
        %s242 = scalar_lea.vmem %s170, 32
        %v243 = vld [vmem:[%s242] sm:$0xff]
        %v244 = vld [vmem:[%s242 + $0x8] sm:$0xff]
        %s245 = scalar_lea.vmem %s1, 32
        %v246 = vld [vmem:[%s245] sm:$0xff]
        %v247 = vld [vmem:[%s245 + $0x8] sm:$0xff]
        %v249 = vsel %vm183, %v243, 0
        %v252 = vsel %vm183, %v244, 0
        %254 = vmatpush.msra.mxu0 0.0
        %255 = vmatpush.msra.mxu0 0.0
        %256 = vmatpush.msra.mxu0 0.0
        %257 = vmatpush.msra.mxu0 0.0
        %258 = vmatpush.msra.mxu0 0.0
        %259 = vmatpush.msra.mxu0 0.0
        %260 = vmatpush.msra.mxu0 0.0
        %261 = vmatpush.msra.mxu0 0.0
        %262 = vmatpush.msra.mxu0 0.0
        %263 = vmatpush.msra.mxu0 0.0
        %264 = vmatpush.msra.mxu0 0.0
        %265 = vmatpush.msra.mxu0 0.0
        %266 = vmatpush.msra.mxu0 0.0
        %267 = vmatpush.msra.mxu0 0.0
        %268 = vmatpush.msra.mxu0 %v247
        %269 = vmatpush.msra.mxu0 %v246
        %270 = vmatmul.f32.gmra.mxu0 %v249
        %v271 = vpop.f32.mrf.mxu0
        %v272 = vadd.f32 0.0, %v271
        %273 = vmatmul.f32.gmra.mxu0 %v252
        %v274 = vpop.f32.mrf.mxu0
        %v275 = vadd.f32 0.0, %v274
        %276 = vdwg.mxu0
        %v277 = vadd.f32 %v237, %v272
        %v278 = vadd.f32 %v240, %v275
        %s279 = scalar_lea.vmem %s170, 48
        %v280 = vld [vmem:[%s279] sm:$0xff]
        %v281 = vld [vmem:[%s279 + $0x8] sm:$0xff]
        %s282 = scalar_lea.vmem %s1, 48
        %v283 = vld [vmem:[%s282] sm:$0xff]
        %v284 = vld [vmem:[%s282 + $0x8] sm:$0xff]
        %v286 = vsel %vm183, %v280, 0
        %v289 = vsel %vm183, %v281, 0
        %291 = vmatpush.msra.mxu0 0.0
        %292 = vmatpush.msra.mxu0 0.0
        %293 = vmatpush.msra.mxu0 0.0
        %294 = vmatpush.msra.mxu0 0.0
        %295 = vmatpush.msra.mxu0 0.0
        %296 = vmatpush.msra.mxu0 0.0
        %297 = vmatpush.msra.mxu0 0.0
        %298 = vmatpush.msra.mxu0 0.0
        %299 = vmatpush.msra.mxu0 0.0
        %300 = vmatpush.msra.mxu0 0.0
        %301 = vmatpush.msra.mxu0 0.0
        %302 = vmatpush.msra.mxu0 0.0
        %303 = vmatpush.msra.mxu0 0.0
        %304 = vmatpush.msra.mxu0 0.0
        %305 = vmatpush.msra.mxu0 %v284
        %306 = vmatpush.msra.mxu0 %v283
        %307 = vmatmul.f32.gmra.mxu0 %v286
        %v308 = vpop.f32.mrf.mxu0
        %v309 = vadd.f32 0.0, %v308
        %310 = vmatmul.f32.gmra.mxu0 %v289
        %v311 = vpop.f32.mrf.mxu0
        %v312 = vadd.f32 0.0, %v311
        %313 = vdwg.mxu0
        %v314 = vadd.f32 %v277, %v309
        %v315 = vadd.f32 %v278, %v312
        %vm316 = vcmask 261120
        %317 = vst.msk [vmem:[%s161] sm:$0xff] %vm316, %v314
        %318 = vst.msk [vmem:[%s161 + $0x8] sm:$0xff] %vm316, %v315
        %s319 = sand.u32 %s87, 1
        %s320 = scalar_lea.sflag [#allocation3], %s319
        %s321 = sand.u32 %s87, 1
        %s322 = smul.addr %s321, 16
        %s323 = scalar_lea.vmem [#allocation2], %s322
        // Predicated region
        $region29: #{learnable_filterbank_forward.1} parent=27 // pred_check
          %p324 = pneg %p97
        $region30: #{learnable_filterbank_forward.1} parent=27 // pred_check_branch
          %326 = sbr.rel (%p324) target = $region32
        $region31: #{learnable_filterbank_forward.1} parent=27 // pred_region
          %s327 = smul.u32 2, %s21
          %329 = vsyncadd %s320, 0
          %s330 = smul.addr %s20, 2
          %s331 = sadd.s32 %s327, %s330
          %s332 = smul.addr %s331, 8
          %s333 = scalar_lea.hbm %s2, %s332
          %s334 = sshll.u32 %s323, 4
          %s335 = int_to_ptr.vmem [resolvable:$true] %s334
          %s336 = sshll.u32 %s333, 4
          %s337 = int_to_ptr.hbm [resolvable:$true] %s336
          %342 = dma.vmem_to_hbm [thread:$0]  %s335, 256, %s337, %s320, 128, 128, 8
        $region32: #{learnable_filterbank_forward.1} parent=27 // pred_fallthru
          _
      $region28: #{learnable_filterbank_forward.1} parent=5 // pred_fallthru
        _
      %p343 = scmp.le.s32.totalorder 2, %s11
      // Predicated region
      $region33: #{learnable_filterbank_forward.1} parent=5 // pred_check
        %p344 = pneg %p343
      $region34: #{learnable_filterbank_forward.1} parent=5 // pred_check_branch
        %346 = sbr.rel (%p344) target = $region36
      $region35: #{learnable_filterbank_forward.1} parent=5 // pred_region
        %s347 = ssub.s32 %s11, 2
        // Predicated region
        $region37: #{learnable_filterbank_forward.1} parent=35 // pred_check
          %p348 = pneg %p103
        $region38: #{learnable_filterbank_forward.1} parent=35 // pred_check_branch
          %350 = sbr.rel (%p348) target = $region40
        $region39: #{learnable_filterbank_forward.1} parent=35 // pred_region
          %s351 = sand.u32 %s88, 1
          %s352 = scalar_lea.sflag [#allocation3], %s351
          %s353 = sand.u32 %s88, 1
          %s354 = smul.addr %s353, 16
          %s355 = scalar_lea.vmem [#allocation2], %s354
          %357 = dma.done %s352, 256
        $region40: #{learnable_filterbank_forward.1} parent=35 // pred_fallthru
          _
      $region36: #{learnable_filterbank_forward.1} parent=5 // pred_fallthru
        _
    $region6: #{learnable_filterbank_forward.1} parent=1 // loop_footer
      %s15 = sadd.s32 1, %s11
    $region7: #{learnable_filterbank_forward.1} parent=1 // loop_footer_branch
      %10 = sbr.rel target = $region3
    $region8: #{learnable_filterbank_forward.1} parent=1 // loop_exit
      _
    %358 = vsyncpa [#allocation3], 1
    %s359 = scalar_lea.sflag [#allocation3], 1
    %360 = vsyncpa %s359, 1

</llo_original>
